<compile_context>
chip_gen: v7x
topology: tpu7x:2x2x1
jax: 0.10.0
libtpu: 0.0.40
codegen_flags: <defaults>
</compile_context>

<pallas_src>
import jax
import jax.numpy as jnp
from jax.experimental import pallas as pl
from jax.experimental.pallas import tpu as pltpu


def _round_up(x, m):
    return ((x + m - 1) // m) * m


def _readout_kernel_single(s_ref, w_ref, o_ref):
    """y-tile = S-tile @ W.T with the whole in_features axis in one block.

    s_ref: (tile_m, K)      S tile
    w_ref: (n_pad,  K)      weight tile, PyTorch [out, in] layout
    o_ref: (tile_m, n_pad)  output tile
    """
    o_ref[...] = jax.lax.dot_general(
        s_ref[...],
        w_ref[...],
        dimension_numbers=(((1,), (1,)), ((), ())),
        preferred_element_type=jnp.float32,
    ).astype(o_ref.dtype)


def _readout_kernel_acc(s_ref, w_ref, o_ref, acc_ref):
    """One (M-tile, K-tile) reduction step of y = S @ W.T.

    s_ref:   (tile_m, tile_k)  S tile
    w_ref:   (n_pad,  tile_k)  weight tile, PyTorch [out, in] layout
    o_ref:   (tile_m, n_pad)   output tile (resident across the K axis)
    acc_ref: (tile_m, n_pad)   f32 accumulator scratch
    """
    @pl.when(pl.program_id(1) == 0)
    def _init():
        acc_ref[...] = jnp.zeros_like(acc_ref)

    acc_ref[...] += jax.lax.dot_general(
        s_ref[...],
        w_ref[...],
        dimension_numbers=(((1,), (1,)), ((), ())),
        preferred_element_type=jnp.float32,
    )

    @pl.when(pl.program_id(1) == pl.num_programs(1) - 1)
    def _finalize():
        o_ref[...] = acc_ref[...].astype(o_ref.dtype)


def esn_readout(S, W, *, tile_m=512, compute_dtype=None,
                vmem_budget_bytes=24 * 1024 * 1024):
    """y = S @ W.T  (nn.Linear with bias=False).

    S: [..., in_features], W: [out_features, in_features]
    returns [..., out_features] in S.dtype.
    compute_dtype: optional cast (e.g. jnp.bfloat16) for the matmul inputs;
                   accumulation is always f32.
    """
    in_features = S.shape[-1]
    out_features, wk = W.shape
    assert wk == in_features

    out_dtype = S.dtype
    lead_shape = S.shape[:-1]
    M = 1
    for d in lead_shape:
        M *= d
    S2 = S.reshape(M, in_features)

    if compute_dtype is not None:
        S2 = S2.astype(compute_dtype)
        W = W.astype(compute_dtype)
    itemsize = jnp.dtype(S2.dtype).itemsize
    out_itemsize = jnp.dtype(out_dtype).itemsize

    # ---- N axis: pad the (small) weight once so the output last dim is a
    # multiple of 128 -> lane-dense, unmasked stores. Sliced off at the end.
    n_pad = _round_up(out_features, 128)
    Wp = W if n_pad == out_features else jnp.pad(
        W, ((0, n_pad - out_features), (0, 0)))
    # ESN readouts are narrow; N stays one full-extent block.

    # ---- M tile: multiple of 8 (16 for sub-32-bit inputs). S itself is NOT
    # padded in HBM; Pallas handles the ragged last M block.
    sub = 8 if itemsize >= 4 else 16
    tile_m = max(sub, min(tile_m, _round_up(M, sub)))
    tile_m = _round_up(tile_m, sub)
    # Bound the per-M-tile output/accumulator footprint for very wide readouts.
    while tile_m > sub and tile_m * n_pad * (4 + 2 * out_itemsize) > vmem_budget_bytes // 2:
        tile_m = max(sub, _round_up(tile_m // 2, sub))
    num_m = pl.cdiv(M, tile_m)
    if num_m == 1 and M > 2 * sub:
        # Keep >= 2 M steps so both v7x TensorCores get work.
        tile_m = _round_up(pl.cdiv(M, 2), sub)
        num_m = pl.cdiv(M, tile_m)

    # ---- K tile: full in_features when the double-buffered working set fits
    # the VMEM budget, otherwise a multiple-of-128 K reduction axis.
    K = in_features
    single_fixed = 2 * tile_m * n_pad * out_itemsize            # out double-buffer
    single_per_k = (2 * tile_m + 2 * n_pad) * itemsize          # S + W double-buffers
    use_single_k = single_fixed + single_per_k * K <= vmem_budget_bytes

    if use_single_k:
        grid_spec = pltpu.PrefetchScalarGridSpec(
            num_scalar_prefetch=0,
            grid=(num_m,),
            in_specs=[
                pl.BlockSpec((tile_m, K), lambda i: (i, 0)),
                pl.BlockSpec((n_pad, K), lambda i: (0, 0)),
            ],
            out_specs=pl.BlockSpec((tile_m, n_pad), lambda i: (i, 0)),
        )
        kernel = _readout_kernel_single
        dim_sem = ("parallel",)
    else:
        fixed = tile_m * n_pad * (4 + 2 * out_itemsize)          # acc scratch + out bufs
        per_k = (2 * tile_m + 2 * n_pad) * itemsize              # S bufs + W bufs
        tile_k = (vmem_budget_bytes - fixed) // max(per_k, 1)
        tile_k_max = max(128, (tile_k // 128) * 128)
        nk = pl.cdiv(K, tile_k_max)
        tile_k = _round_up(pl.cdiv(K, nk), 128)
        k_pad = nk * tile_k
        if k_pad != K:
            # Zero-pad K so every *reduction* block is fully in-bounds
            # (OOB garbage in a reduction block would corrupt the sum).
            S2 = jnp.pad(S2, ((0, 0), (0, k_pad - K)))
            Wp = jnp.pad(Wp, ((0, 0), (0, k_pad - K)))
            K = k_pad
        num_k = K // tile_k

        grid_spec = pltpu.PrefetchScalarGridSpec(
            num_scalar_prefetch=0,
            grid=(num_m, num_k),
            in_specs=[
                pl.BlockSpec((tile_m, tile_k), lambda i, k: (i, k)),
                pl.BlockSpec((n_pad, tile_k), lambda i, k: (0, k)),
            ],
            out_specs=pl.BlockSpec((tile_m, n_pad), lambda i, k: (i, 0)),
            scratch_shapes=[pltpu.VMEM((tile_m, n_pad), jnp.float32)],
        )
        kernel = _readout_kernel_acc
        dim_sem = ("parallel", "arbitrary")

    out = pl.pallas_call(
        kernel,
        out_shape=jax.ShapeDtypeStruct((M, n_pad), out_dtype),
        grid_spec=grid_spec,
        compiler_params=pltpu.CompilerParams(
            dimension_semantics=dim_sem,
            vmem_limit_bytes=32 * 1024 * 1024,  # v5e scoped default is only 16 MiB
        ),
    )(S2, Wp)

    if n_pad != out_features:
        out = out[:, :out_features]
    return out.reshape(*lead_shape, out_features)


if __name__ == "__main__":
    key = jax.random.PRNGKey(0)
    k_s, k_w = jax.random.split(key)

    batch, seq, in_features, out_features = 2, 8, 32, 16

    # Deterministic synthetic parameters (matches nn.Linear weight shape).
    W = jax.random.uniform(
        k_w, (out_features, in_features), dtype=jnp.float32,
        minval=-1.0 / jnp.sqrt(in_features), maxval=1.0 / jnp.sqrt(in_features),
    )
    S = jax.random.normal(k_s, (batch, seq, in_features), dtype=jnp.float32)

    # f32 path (exact nn.Linear(bias=False) semantics).
    y = jax.block_until_ready(esn_readout(S, W))
    y_ref = jnp.einsum("bti,oi->bto", S, W)
    assert y.shape == (batch, seq, out_features)
    assert jnp.allclose(y, y_ref, atol=1e-5, rtol=1e-5)

    # bf16-input fast path (f32 accumulation) — the mem-bound optimization.
    y_bf16 = jax.block_until_ready(esn_readout(S, W, compute_dtype=jnp.bfloat16))
    assert y_bf16.shape == (batch, seq, out_features)
    assert jnp.allclose(y_bf16, y_ref, atol=5e-2, rtol=5e-2)

    print("KERNEL_OK")
</pallas_src>

<mosaic_0001>
module attributes {stable_mosaic.version = 11 : i64} {
  func.func @_readout_kernel_single(%arg0: i32, %arg1: memref<16x32xf32, #tpu.memory_space<vmem>>, %arg2: memref<128x32xf32, #tpu.memory_space<vmem>>, %arg3: memref<16x128xf32, #tpu.memory_space<vmem>>) attributes {dimension_semantics = [#tpu.dimension_semantics<parallel>], iteration_bounds = array<i64: 1>, scalar_prefetch = 0 : i64, scratch_operands = 0 : i64, tpu.core_type = #tpu.core_type<tc>, window_params = [{transform_indices = @transform_0, window_bounds = array<i64: 16, 32>}, {pipeline_mode = #tpu.pipeline_mode<synchronous>, transform_indices = @transform_1, window_bounds = array<i64: 128, 32>}, {transform_indices = @transform_2, window_bounds = array<i64: 16, 128>}]} {
    %c0 = arith.constant 0 : index
    %c0_0 = arith.constant 0 : index
    %0 = vector.load %arg1[%c0, %c0_0] : memref<16x32xf32, #tpu.memory_space<vmem>>, vector<16x32xf32>
    %c0_1 = arith.constant 0 : index
    %c0_2 = arith.constant 0 : index
    %1 = vector.load %arg2[%c0_1, %c0_2] : memref<128x32xf32, #tpu.memory_space<vmem>>, vector<128x32xf32>
    %cst = arith.constant dense<0.000000e+00> : vector<16x128xf32>
    %2 = tpu.matmul %0, %1, %cst {dimension_numbers = #tpu.dot_dimension_numbers<[1], [1], [0], [0], [0, 0, 1, 0], [], []>} : vector<16x32xf32>, vector<128x32xf32>, vector<16x128xf32> -> vector<16x128xf32>
    %c0_3 = arith.constant 0 : index
    %c0_4 = arith.constant 0 : index
    %3 = vector.load %arg3[%c0_3, %c0_4] : memref<16x128xf32, #tpu.memory_space<vmem>>, vector<16x128xf32>
    tpu.vector_store %arg3[%c0_3, %c0_4], %2 {strides = array<i32>} : memref<16x128xf32, #tpu.memory_space<vmem>>, vector<16x128xf32>,
    return
  }
  func.func @transform_0(%arg0: i32) -> (i32, i32) {
    %c0_i32 = arith.constant 0 : i32
    %c0_i32_0 = arith.constant 0 : i32
    return %arg0, %c0_i32 : i32, i32
  }
  func.func @transform_1(%arg0: i32) -> (i32, i32) {
    %c0_i32 = arith.constant 0 : i32
    %c0_i32_0 = arith.constant 0 : i32
    %c0_i32_1 = arith.constant 0 : i32
    return %c0_i32, %c0_i32_0 : i32, i32
  }
  func.func @transform_2(%arg0: i32) -> (i32, i32) {
    %c0_i32 = arith.constant 0 : i32
    %c0_i32_0 = arith.constant 0 : i32
    return %arg0, %c0_i32 : i32, i32
  }
}

</mosaic_0001>

<llo_original>
// kernel: tpu_custom_call.1
$region0: #{tpu_custom_call.1}
  #allocation0 [shape = 'u32[]', space=smem, size = 0x4, offset = 0x4, fixed_abs, tag = 'smem constant byte address 0x4 - core index']
  #allocation1 [shape = 'u32[144,128]{1,0:T(1,128)}', space=vmem, size = 0x12000, scoped, tag = 'internal scratch']
  %s0 = inlined_call_operand.vmem [shape: f32[16,32], index: 0, kind: input, shape index: {}]
  %s1 = inlined_call_operand.vmem [shape: f32[128,32], index: 1, kind: input, shape index: {}]
  %s2 = inlined_call_operand.hbm [shape: f32[16,128], index: 2, kind: output, shape index: {}]
  %s3 = sld [smem:[#allocation0]]
  $region18: #{tpu_custom_call.1} parent=0
    _
  %s5 = ssub.s32 1, %s3
  %s6 = scalar_select 0, %s5, %s3
  $region1: #{tpu_custom_call.1} parent=0
    #allocation2 [shape = 'u8[8192]{0}', space=vmem, size = 0x2000, scoped, tag = 'output window, operand 0, single buffered']
    #allocation3 [shape = 's32[1]{0}', space=sflag, size = 0x4, scoped, tag = 'scoped memory for tpu_custom_call.1']
    %7 = vsyncpa [#allocation3], 0
    // Predicated region
    $region2: #{tpu_custom_call.1} parent=1 // pred_check
      _
    $region3: #{tpu_custom_call.1} parent=1 // pred_check_branch
      %9 = sbr.rel (0) target = $region5
    $region4: #{tpu_custom_call.1} parent=1 // pred_region
      _
    $region5: #{tpu_custom_call.1} parent=1 // pred_fallthru
      _
    // Predicated region
    $region6: #{tpu_custom_call.1} parent=1 // pred_check
      _
    $region7: #{tpu_custom_call.1} parent=1 // pred_check_branch
      %11 = sbr.rel (0) target = $region9
    $region8: #{tpu_custom_call.1} parent=1 // pred_region
      _
    $region9: #{tpu_custom_call.1} parent=1 // pred_fallthru
      _
    %v12 = vld [vmem:[%s0] sm:$0xff]
    %v13 = vld [vmem:[%s0 + $0x8] sm:$0xff]
    %v14 = vld [vmem:[%s1] sm:$0xff]
    %v15 = vld [vmem:[%s1 + $0x8] sm:$0xff]
    %v16 = vld [vmem:[%s1 + $0x10] sm:$0xff]
    %v17 = vld [vmem:[%s1 + $0x18] sm:$0xff]
    %v18 = vld [vmem:[%s1 + $0x20] sm:$0xff]
    %v19 = vld [vmem:[%s1 + $0x28] sm:$0xff]
    %v20 = vld [vmem:[%s1 + $0x30] sm:$0xff]
    %v21 = vld [vmem:[%s1 + $0x38] sm:$0xff]
    %v22 = vld [vmem:[%s1 + $0x40] sm:$0xff]
    %v23 = vld [vmem:[%s1 + $0x48] sm:$0xff]
    %v24 = vld [vmem:[%s1 + $0x50] sm:$0xff]
    %v25 = vld [vmem:[%s1 + $0x58] sm:$0xff]
    %v26 = vld [vmem:[%s1 + $0x60] sm:$0xff]
    %v27 = vld [vmem:[%s1 + $0x68] sm:$0xff]
    %v28 = vld [vmem:[%s1 + $0x70] sm:$0xff]
    %v29 = vld [vmem:[%s1 + $0x78] sm:$0xff]
    %vm30 = vcmask 261120
    %v32 = vsel %vm30, %v12, 0
    %v35 = vsel %vm30, %v13, 0
    %v38 = vsel %vm30, %v14, 0
    %v41 = vsel %vm30, %v15, 0
    %v44 = vsel %vm30, %v16, 0
    %v47 = vsel %vm30, %v17, 0
    %v50 = vsel %vm30, %v18, 0
    %v53 = vsel %vm30, %v19, 0
    %v56 = vsel %vm30, %v20, 0
    %v59 = vsel %vm30, %v21, 0
    %v62 = vsel %vm30, %v22, 0
    %v65 = vsel %vm30, %v23, 0
    %v68 = vsel %vm30, %v24, 0
    %v71 = vsel %vm30, %v25, 0
    %v74 = vsel %vm30, %v26, 0
    %v77 = vsel %vm30, %v27, 0
    %v80 = vsel %vm30, %v28, 0
    %v83 = vsel %vm30, %v29, 0
    %85 = vmatprep.subr.mxu0 0.0
    %86 = vmatpush1.xpose.msra.mxu0 %v38
    %87 = vmatprep.subr.mxu0 0.0
    %88 = vmatpush1.xpose.msra.mxu0 %v41
    %89 = vmatprep.subr.mxu0 0.0
    %90 = vmatpush1.xpose.msra.mxu0 %v44
    %91 = vmatprep.subr.mxu0 0.0
    %92 = vmatpush1.xpose.msra.mxu0 %v47
    %93 = vmatprep.subr.mxu0 0.0
    %94 = vmatpush1.xpose.msra.mxu0 %v50
    %95 = vmatprep.subr.mxu0 0.0
    %96 = vmatpush1.xpose.msra.mxu0 %v53
    %97 = vmatprep.subr.mxu0 0.0
    %98 = vmatpush1.xpose.msra.mxu0 %v56
    %99 = vmatprep.subr.mxu0 0.0
    %100 = vmatpush1.xpose.msra.mxu0 %v59
    %101 = vmatprep.subr.mxu0 0.0
    %102 = vmatpush1.xpose.msra.mxu0 %v62
    %103 = vmatprep.subr.mxu0 0.0
    %104 = vmatpush1.xpose.msra.mxu0 %v65
    %105 = vmatprep.subr.mxu0 0.0
    %106 = vmatpush1.xpose.msra.mxu0 %v68
    %107 = vmatprep.subr.mxu0 0.0
    %108 = vmatpush1.xpose.msra.mxu0 %v71
    %109 = vmatprep.subr.mxu0 0.0
    %110 = vmatpush1.xpose.msra.mxu0 %v74
    %111 = vmatprep.subr.mxu0 0.0
    %112 = vmatpush1.xpose.msra.mxu0 %v77
    %113 = vmatprep.subr.mxu0 0.0
    %114 = vmatpush1.xpose.msra.mxu0 %v80
    %115 = vmatprep.subr.mxu0 0.0
    %116 = vmatpush1.xpose.msra.mxu0 %v83
    %117 = vmatprep.subr.mxu0 0.0
    %118 = vmatpush1.xpose.msra.mxu0 0.0
    %119 = vmatprep.subr.mxu0 0.0
    %120 = vmatpush1.xpose.msra.mxu0 0.0
    %121 = vmatprep.subr.mxu0 0.0
    %122 = vmatpush1.xpose.msra.mxu0 0.0
    %123 = vmatprep.subr.mxu0 0.0
    %124 = vmatpush1.xpose.msra.mxu0 0.0
    %125 = vmatprep.subr.mxu0 0.0
    %126 = vmatpush1.xpose.msra.mxu0 0.0
    %127 = vmatprep.subr.mxu0 0.0
    %128 = vmatpush1.xpose.msra.mxu0 0.0
    %129 = vmatprep.subr.mxu0 0.0
    %130 = vmatpush1.xpose.msra.mxu0 0.0
    %131 = vmatprep.subr.mxu0 0.0
    %132 = vmatpush1.xpose.msra.mxu0 0.0
    %133 = vmatprep.subr.mxu0 0.0
    %134 = vmatpush1.xpose.msra.mxu0 0.0
    %135 = vmatprep.subr.mxu0 0.0
    %136 = vmatpush1.xpose.msra.mxu0 0.0
    %137 = vmatprep.subr.mxu0 0.0
    %138 = vmatpush1.xpose.msra.mxu0 0.0
    %139 = vmatprep.subr.mxu0 0.0
    %140 = vmatpush1.xpose.msra.mxu0 0.0
    %141 = vmatprep.subr.mxu0 0.0
    %142 = vmatpush1.xpose.msra.mxu0 0.0
    %143 = vmatprep.subr.mxu0 0.0
    %144 = vmatpush1.xpose.msra.mxu0 0.0
    %145 = vmatprep.subr.mxu0 0.0
    %146 = vmatpush1.xpose.msra.mxu0 0.0
    %147 = vmatprep.subr.mxu0 0.0
    %148 = vmatpush1.xpose.msra.mxu0 0.0
    %149 = vmatprep.mubr.f32.mxu0 0.0
    %150 = vmatmul.mubr.f32.gmra.mrb[0].mxu0 %v32
    %v151 = vpop.f32.mrb[0].mxu0
    %v152 = vadd.f32 0.0, %v151
    %v153 = vpop.f32.mrb[0].mxu0
    %154 = vmatprep.mubr.f32.mxu0 0.0
    %155 = vmatmul.mubr.f32.gmra.mrb[0].mxu0 %v35
    %v156 = vpop.f32.mrb[0].mxu0
    %v157 = vadd.f32 0.0, %v156
    %v158 = vpop.f32.mrb[0].mxu0
    %159 = vdwg.mxu0
    %160 = vst [vmem:[#allocation2] sm:$0xff] %v152
    %161 = vst [vmem:[#allocation2 + $0x8] sm:$0xff] %v157
    // Predicated region
    $region10: #{tpu_custom_call.1} parent=1 // pred_check
      _
    $region11: #{tpu_custom_call.1} parent=1 // pred_check_branch
      %163 = sbr.rel (0) target = $region13
    $region12: #{tpu_custom_call.1} parent=1 // pred_region
      %s165 = ssub.s32 256, 256
      %166 = vsyncadd [#allocation3], %s165
      %s167 = sshll.u32 [#allocation2], 4
      %s168 = int_to_ptr.vmem [resolvable:$true] %s167
      %173 = dma.vmem_to_hbm [thread:$0]  %s168, 256, %s2, [#allocation3], 128, 128, 8
    $region13: #{tpu_custom_call.1} parent=1 // pred_fallthru
      _
    // Predicated region
    $region14: #{tpu_custom_call.1} parent=1 // pred_check
      _
    $region15: #{tpu_custom_call.1} parent=1 // pred_check_branch
      %175 = sbr.rel (0) target = $region17
    $region16: #{tpu_custom_call.1} parent=1 // pred_region
      %176 = dma.done [#allocation3], 256
    $region17: #{tpu_custom_call.1} parent=1 // pred_fallthru
      _
    %177 = vsyncpa [#allocation3], 1

</llo_original>
